<compile_context>
chip_gen: v7x
topology: tpu7x:2x2x1
jax: 0.10.0
libtpu: 0.0.40
codegen_flags: <defaults>
</compile_context>

<pallas_src>
import functools

import jax
import jax.numpy as jnp
from jax.experimental import pallas as pl
from jax.experimental.pallas import tpu as pltpu


def policy_kernel(x_ref, w1_ref, w2_ref, w3f_ref, bias_ref, out_ref,
                  *, hidden, num_out, use_bf16):
    # All refs are small VMEM tiles; weights are VMEM-resident across the grid.
    x = x_ref[...]

    # Packed biases: row 0 = b1, row 1 = b2, row 2 = [b3 | b3_] (lane-padded).
    b1 = bias_ref[0:1, :hidden]
    b2 = bias_ref[1:2, :hidden]
    b3 = bias_ref[2:3, :2 * num_out]

    if use_bf16:
        # bf16 into the MXU, f32 accumulate, f32 element-wise math (VPU/EUP).
        x = x.astype(jnp.bfloat16)
        w1 = w1_ref[...].astype(jnp.bfloat16)
        w2 = w2_ref[...].astype(jnp.bfloat16)
        w3f = w3f_ref[...].astype(jnp.bfloat16)
    else:
        w1 = w1_ref[...]
        w2 = w2_ref[...]
        w3f = w3f_ref[...]

    # linear1 + relu
    h1 = jnp.dot(x, w1, preferred_element_type=jnp.float32) + b1
    h1 = jnp.maximum(h1, 0.0)
    if use_bf16:
        h1 = h1.astype(jnp.bfloat16)

    # linear2 + relu
    h2 = jnp.dot(h1, w2, preferred_element_type=jnp.float32) + b2
    h2 = jnp.maximum(h2, 0.0)
    if use_bf16:
        h2 = h2.astype(jnp.bfloat16)

    # fused head: [linear3 | linear3_] in one matmul
    head = jnp.dot(h2, w3f, preferred_element_type=jnp.float32) + b3

    # sigmoid on the first num_out lanes (mu), tanh on the rest (sigma_sq)
    lane = jax.lax.broadcasted_iota(jnp.int32, head.shape, 1)
    fused = jnp.where(lane < num_out, jax.nn.sigmoid(head), jnp.tanh(head))
    out_ref[...] = fused.astype(out_ref.dtype)


def policy_forward(x, params, *, tile_m=256, use_bf16=False):
    """x: (B, num_inputs) float32. params: dict of pre-transposed weights/biases.

    Returns (mu, sigma_sq), each (B, num_outputs) float32.
    """
    B, num_inputs = x.shape
    hidden = params["w1"].shape[1]
    num_out = params["w3"].shape[1]

    # ---- one-time wrapper-side packing (would be done once per model) ----
    # Fused head weight: (hidden, 2*num_out)
    w3f = jnp.concatenate([params["w3"], params["w3_"]], axis=1)
    # Packed biases: (3, W), W = max(hidden, 2*num_out)
    W = max(hidden, 2 * num_out)
    bias_pack = jnp.zeros((3, W), jnp.float32)
    bias_pack = bias_pack.at[0, :hidden].set(params["b1"])
    bias_pack = bias_pack.at[1, :hidden].set(params["b2"])
    bias_pack = bias_pack.at[2, :num_out].set(params["b3"])
    bias_pack = bias_pack.at[2, num_out:2 * num_out].set(params["b3_"])

    w1, w2 = params["w1"], params["w2"]
    if use_bf16:
        # Halve weight DMA / VMEM for the pipelined large-batch case.
        w1, w2, w3f = (w1.astype(jnp.bfloat16), w2.astype(jnp.bfloat16),
                       w3f.astype(jnp.bfloat16))

    # ---- batch tiling: pad B to a multiple of the tile (>= multiple of 8) ----
    B_pad = ((B + 7) // 8) * 8
    if B_pad >= tile_m:
        tm = tile_m
        B_pad = ((B_pad + tm - 1) // tm) * tm
    else:
        tm = B_pad
    if B_pad != B:
        x = jnp.pad(x, ((0, B_pad - B), (0, 0)))

    grid = (B_pad // tm,)

    kernel = functools.partial(policy_kernel, hidden=hidden, num_out=num_out,
                               use_bf16=use_bf16)

    fused = pl.pallas_call(
        kernel,
        out_shape=jax.ShapeDtypeStruct((B_pad, 2 * num_out), jnp.float32),
        grid=grid,
        in_specs=[
            # batch tile marches with the grid
            pl.BlockSpec((tm, num_inputs), lambda i: (i, 0)),
            # weights / biases stay VMEM-resident (constant block index)
            pl.BlockSpec(w1.shape, lambda i: (0, 0)),
            pl.BlockSpec(w2.shape, lambda i: (0, 0)),
            pl.BlockSpec(w3f.shape, lambda i: (0, 0)),
            pl.BlockSpec(bias_pack.shape, lambda i: (0, 0)),
        ],
        out_specs=pl.BlockSpec((tm, 2 * num_out), lambda i: (i, 0)),
        compiler_params=pltpu.CompilerParams(
            dimension_semantics=("parallel",)),  # megacore on v7x
    )(x, w1, w2, w3f, bias_pack)

    mu = fused[:B, :num_out]
    sigma_sq = fused[:B, num_out:]
    return mu, sigma_sq


def init_params(key, num_inputs, hidden_size, num_outputs):
    """Deterministic init mimicking PyTorch nn.Linear default (uniform +-1/sqrt(fan_in)).
    Weights are stored transposed: (in_features, out_features)."""
    def linear(k, fan_in, fan_out):
        kw, kb = jax.random.split(k)
        bound = 1.0 / jnp.sqrt(fan_in)
        w = jax.random.uniform(kw, (fan_in, fan_out), jnp.float32, -bound, bound)
        b = jax.random.uniform(kb, (fan_out,), jnp.float32, -bound, bound)
        return w, b

    k1, k2, k3, k4 = jax.random.split(key, 4)
    w1, b1 = linear(k1, num_inputs, hidden_size)
    w2, b2 = linear(k2, hidden_size, hidden_size)
    w3, b3 = linear(k3, hidden_size, num_outputs)
    w3_, b3_ = linear(k4, hidden_size, num_outputs)
    return {"w1": w1, "b1": b1, "w2": w2, "b2": b2,
            "w3": w3, "b3": b3, "w3_": w3_, "b3_": b3_}


def policy_reference(x, p):
    """Pure-JAX reference matching the PyTorch forward."""
    h1 = jax.nn.relu(x @ p["w1"] + p["b1"])
    h2 = jax.nn.relu(h1 @ p["w2"] + p["b2"])
    mu = jax.nn.sigmoid(h2 @ p["w3"] + p["b3"])
    sigma_sq = jnp.tanh(h2 @ p["w3_"] + p["b3_"])
    return mu, sigma_sq


if __name__ == "__main__":
    batch = 8
    num_inputs = 16
    hidden_size = 32
    num_outputs = 4

    key = jax.random.PRNGKey(0)
    kx, kp = jax.random.split(key)
    x = jax.random.normal(kx, (batch, num_inputs), jnp.float32)
    params = init_params(kp, num_inputs, hidden_size, num_outputs)

    # f32 MXU inputs so the tight allclose tolerance holds.
    # TODO(synk): flip use_bf16=True on v6e/v7x large-batch rollouts (relax tol).
    mu, sigma_sq = policy_forward(x, params, use_bf16=False)
    jax.block_until_ready((mu, sigma_sq))

    mu_ref, sigma_ref = policy_reference(x, params)
    assert mu.shape == (batch, num_outputs)
    assert sigma_sq.shape == (batch, num_outputs)
    assert jnp.allclose(mu, mu_ref, atol=1e-5, rtol=1e-5)
    assert jnp.allclose(sigma_sq, sigma_ref, atol=1e-5, rtol=1e-5)

    # Also exercise the batched / tiled path (multiple grid steps, padding).
    big_x = jax.random.normal(kx, (1000, num_inputs), jnp.float32)
    mu_b, sg_b = policy_forward(big_x, params, tile_m=256)
    jax.block_until_ready((mu_b, sg_b))
    mu_br, sg_br = policy_reference(big_x, params)
    assert jnp.allclose(mu_b, mu_br, atol=1e-5, rtol=1e-5)
    assert jnp.allclose(sg_b, sg_br, atol=1e-5, rtol=1e-5)

    print("KERNEL_OK")
</pallas_src>

<mosaic_0001>
module attributes {stable_mosaic.version = 11 : i64} {
  func.func @policy_kernel(%arg0: i32, %arg1: memref<8x16xf32, #tpu.memory_space<vmem>>, %arg2: memref<16x32xf32, #tpu.memory_space<vmem>>, %arg3: memref<32x32xf32, #tpu.memory_space<vmem>>, %arg4: memref<32x8xf32, #tpu.memory_space<vmem>>, %arg5: memref<3x32xf32, #tpu.memory_space<vmem>>, %arg6: memref<8x8xf32, #tpu.memory_space<vmem>>) attributes {dimension_semantics = [#tpu.dimension_semantics<parallel>], iteration_bounds = array<i64: 1>, scalar_prefetch = 0 : i64, scratch_operands = 0 : i64, tpu.core_type = #tpu.core_type<tc>, window_params = [{transform_indices = @transform_0, window_bounds = array<i64: 8, 16>}, {pipeline_mode = #tpu.pipeline_mode<synchronous>, transform_indices = @transform_1, window_bounds = array<i64: 16, 32>}, {pipeline_mode = #tpu.pipeline_mode<synchronous>, transform_indices = @transform_2, window_bounds = array<i64: 32, 32>}, {pipeline_mode = #tpu.pipeline_mode<synchronous>, transform_indices = @transform_3, window_bounds = array<i64: 32, 8>}, {pipeline_mode = #tpu.pipeline_mode<synchronous>, transform_indices = @transform_4, window_bounds = array<i64: 3, 32>}, {transform_indices = @transform_5, window_bounds = array<i64: 8, 8>}]} {
    %c0 = arith.constant 0 : index
    %c0_0 = arith.constant 0 : index
    %0 = vector.load %arg1[%c0, %c0_0] : memref<8x16xf32, #tpu.memory_space<vmem>>, vector<8x16xf32>
    %c0_1 = arith.constant 0 : index
    %c0_2 = arith.constant 0 : index
    %1 = vector.load %arg5[%c0_1, %c0_2] : memref<3x32xf32, #tpu.memory_space<vmem>>, vector<1x32xf32>
    %c1 = arith.constant 1 : index
    %c0_3 = arith.constant 0 : index
    %2 = vector.load %arg5[%c1, %c0_3] : memref<3x32xf32, #tpu.memory_space<vmem>>, vector<1x32xf32>
    %c2 = arith.constant 2 : index
    %c0_4 = arith.constant 0 : index
    %3 = vector.load %arg5[%c2, %c0_4] : memref<3x32xf32, #tpu.memory_space<vmem>>, vector<1x8xf32>
    %c0_5 = arith.constant 0 : index
    %c0_6 = arith.constant 0 : index
    %4 = vector.load %arg2[%c0_5, %c0_6] : memref<16x32xf32, #tpu.memory_space<vmem>>, vector<16x32xf32>
    %c0_7 = arith.constant 0 : index
    %c0_8 = arith.constant 0 : index
    %5 = vector.load %arg3[%c0_7, %c0_8] : memref<32x32xf32, #tpu.memory_space<vmem>>, vector<32x32xf32>
    %c0_9 = arith.constant 0 : index
    %c0_10 = arith.constant 0 : index
    %6 = vector.load %arg4[%c0_9, %c0_10] : memref<32x8xf32, #tpu.memory_space<vmem>>, vector<32x8xf32>
    %cst = arith.constant dense<0.000000e+00> : vector<8x32xf32>
    %7 = tpu.matmul %0, %4, %cst {dimension_numbers = #tpu.dot_dimension_numbers<[1], [0], [0], [1], [0, 0, 1, 1], [], []>} : vector<8x16xf32>, vector<16x32xf32>, vector<8x32xf32> -> vector<8x32xf32>
    %8 = vector.broadcast %1 : vector<1x32xf32> to vector<8x32xf32>
    %9 = arith.addf %7, %8 : vector<8x32xf32>
    %cst_11 = arith.constant 0.000000e+00 : f32
    %10 = vector.broadcast %cst_11 : f32 to vector<8x32xf32>
    %11 = arith.maximumf %9, %10 : vector<8x32xf32>
    %cst_12 = arith.constant dense<0.000000e+00> : vector<8x32xf32>
    %12 = tpu.matmul %11, %5, %cst_12 {dimension_numbers = #tpu.dot_dimension_numbers<[1], [0], [0], [1], [0, 0, 1, 1], [], []>} : vector<8x32xf32>, vector<32x32xf32>, vector<8x32xf32> -> vector<8x32xf32>
    %13 = vector.broadcast %2 : vector<1x32xf32> to vector<8x32xf32>
    %14 = arith.addf %12, %13 : vector<8x32xf32>
    %cst_13 = arith.constant 0.000000e+00 : f32
    %15 = vector.broadcast %cst_13 : f32 to vector<8x32xf32>
    %16 = arith.maximumf %14, %15 : vector<8x32xf32>
    %cst_14 = arith.constant dense<0.000000e+00> : vector<8x8xf32>
    %17 = tpu.matmul %16, %6, %cst_14 {dimension_numbers = #tpu.dot_dimension_numbers<[1], [0], [0], [1], [0, 0, 1, 1], [], []>} : vector<8x32xf32>, vector<32x8xf32>, vector<8x8xf32> -> vector<8x8xf32>
    %18 = vector.broadcast %3 : vector<1x8xf32> to vector<8x8xf32>
    %19 = arith.addf %17, %18 : vector<8x8xf32>
    %20 = tpu.iota {dimensions = array<i32: 1>} : vector<8x8xi32>
    %c4_i32 = arith.constant 4 : i32
    %21 = vector.broadcast %c4_i32 : i32 to vector<8x8xi32>
    %22 = arith.cmpi slt, %20, %21 : vector<8x8xi32>
    %23 = arith.negf %19 : vector<8x8xf32>
    %24 = math.exp %23 : vector<8x8xf32>
    %cst_15 = arith.constant 1.000000e+00 : f32
    %25 = vector.broadcast %cst_15 : f32 to vector<8x8xf32>
    %26 = arith.addf %25, %24 : vector<8x8xf32>
    %27 = arith.divf %25, %26 : vector<8x8xf32>
    %28 = math.tanh %19 : vector<8x8xf32>
    %29 = arith.select %22, %27, %28 : vector<8x8xi1>, vector<8x8xf32>
    %c0_16 = arith.constant 0 : index
    %c0_17 = arith.constant 0 : index
    %30 = vector.load %arg6[%c0_16, %c0_17] : memref<8x8xf32, #tpu.memory_space<vmem>>, vector<8x8xf32>
    tpu.vector_store %arg6[%c0_16, %c0_17], %29 {strides = array<i32>} : memref<8x8xf32, #tpu.memory_space<vmem>>, vector<8x8xf32>,
    return
  }
  func.func @transform_0(%arg0: i32) -> (i32, i32) {
    %c0_i32 = arith.constant 0 : i32
    %c0_i32_0 = arith.constant 0 : i32
    return %arg0, %c0_i32 : i32, i32
  }
  func.func @transform_1(%arg0: i32) -> (i32, i32) {
    %c0_i32 = arith.constant 0 : i32
    %c0_i32_0 = arith.constant 0 : i32
    %c0_i32_1 = arith.constant 0 : i32
    return %c0_i32, %c0_i32_0 : i32, i32
  }
  func.func @transform_2(%arg0: i32) -> (i32, i32) {
    %c0_i32 = arith.constant 0 : i32
    %c0_i32_0 = arith.constant 0 : i32
    %c0_i32_1 = arith.constant 0 : i32
    return %c0_i32, %c0_i32_0 : i32, i32
  }
  func.func @transform_3(%arg0: i32) -> (i32, i32) {
    %c0_i32 = arith.constant 0 : i32
    %c0_i32_0 = arith.constant 0 : i32
    %c0_i32_1 = arith.constant 0 : i32
    return %c0_i32, %c0_i32_0 : i32, i32
  }
  func.func @transform_4(%arg0: i32) -> (i32, i32) {
    %c0_i32 = arith.constant 0 : i32
    %c0_i32_0 = arith.constant 0 : i32
    %c0_i32_1 = arith.constant 0 : i32
    return %c0_i32, %c0_i32_0 : i32, i32
  }
  func.func @transform_5(%arg0: i32) -> (i32, i32) {
    %c0_i32 = arith.constant 0 : i32
    %c0_i32_0 = arith.constant 0 : i32
    return %arg0, %c0_i32 : i32, i32
  }
}

</mosaic_0001>

<llo_original>
// kernel: tpu_custom_call.1
$region0: #{tpu_custom_call.1}
  #allocation0 [shape = 'u32[]', space=smem, size = 0x4, offset = 0x4, fixed_abs, tag = 'smem constant byte address 0x4 - core index']
  #allocation1 [shape = 'u32[144,128]{1,0:T(1,128)}', space=vmem, size = 0x12000, scoped, tag = 'internal scratch']
  %s0 = inlined_call_operand.vmem [shape: f32[8,16], index: 0, kind: input, shape index: {}]
  %s1 = inlined_call_operand.hbm [shape: f32[16,32], index: 1, kind: input, shape index: {}]
  %s2 = inlined_call_operand.vmem [shape: f32[32,32], index: 2, kind: input, shape index: {}]
  %s3 = inlined_call_operand.vmem [shape: f32[32,8], index: 3, kind: input, shape index: {}]
  %s4 = inlined_call_operand.vmem [shape: f32[3,32], index: 4, kind: input, shape index: {}]
  %s5 = inlined_call_operand.hbm [shape: f32[8,8], index: 5, kind: output, shape index: {}]
  %s6 = sld [smem:[#allocation0]]
  $region34: #{tpu_custom_call.1} parent=0
    _
  %s8 = ssub.s32 1, %s6
  %s9 = scalar_select 0, %s8, %s6
  $region1: #{tpu_custom_call.1} parent=0
    #allocation2 [shape = 'u8[8192]{0}', space=vmem, size = 0x2000, scoped, tag = 'input window, operand 1, single buffered']
    #allocation3 [shape = 's32[1]{0}', space=sflag, size = 0x4, scoped, tag = 'scoped memory for tpu_custom_call.1']
    #allocation4 [shape = 's32[1]{0}', space=sflag, size = 0x4, scoped, tag = 'scoped memory for tpu_custom_call.1']
    #allocation5 [shape = 'u8[4096]{0}', space=vmem, size = 0x1000, scoped, tag = 'output window, operand 0, single buffered']
    %10 = vsyncpa [#allocation3], 0
    %11 = vsyncpa [#allocation4], 0
    // Predicated region
    $region2: #{tpu_custom_call.1} parent=1 // pred_check
      _
    $region3: #{tpu_custom_call.1} parent=1 // pred_check_branch
      %13 = sbr.rel (0) target = $region5
    $region4: #{tpu_custom_call.1} parent=1 // pred_region
      _
    $region5: #{tpu_custom_call.1} parent=1 // pred_fallthru
      _
    // Predicated region
    $region6: #{tpu_custom_call.1} parent=1 // pred_check
      _
    $region7: #{tpu_custom_call.1} parent=1 // pred_check_branch
      %15 = sbr.rel (0) target = $region9
    $region8: #{tpu_custom_call.1} parent=1 // pred_region
      %s17 = ssub.s32 256, 256
      %18 = vsyncadd [#allocation3], %s17
      %s19 = sshll.u32 [#allocation2], 4
      %s20 = int_to_ptr.vmem [resolvable:$true] %s19
      %25 = dma.hbm_to_vmem [thread:$0]  %s1, 256, %s20, [#allocation3], 128, 128, 8
    $region9: #{tpu_custom_call.1} parent=1 // pred_fallthru
      _
    // Predicated region
    $region10: #{tpu_custom_call.1} parent=1 // pred_check
      _
    $region11: #{tpu_custom_call.1} parent=1 // pred_check_branch
      %27 = sbr.rel (0) target = $region13
    $region12: #{tpu_custom_call.1} parent=1 // pred_region
      _
    $region13: #{tpu_custom_call.1} parent=1 // pred_fallthru
      _
    // Predicated region
    $region14: #{tpu_custom_call.1} parent=1 // pred_check
      _
    $region15: #{tpu_custom_call.1} parent=1 // pred_check_branch
      %29 = sbr.rel (0) target = $region17
    $region16: #{tpu_custom_call.1} parent=1 // pred_region
      _
    $region17: #{tpu_custom_call.1} parent=1 // pred_fallthru
      _
    // Predicated region
    $region18: #{tpu_custom_call.1} parent=1 // pred_check
      _
    $region19: #{tpu_custom_call.1} parent=1 // pred_check_branch
      %31 = sbr.rel (0) target = $region21
    $region20: #{tpu_custom_call.1} parent=1 // pred_region
      _
    $region21: #{tpu_custom_call.1} parent=1 // pred_fallthru
      _
    // Predicated region
    $region22: #{tpu_custom_call.1} parent=1 // pred_check
      _
    $region23: #{tpu_custom_call.1} parent=1 // pred_check_branch
      %33 = sbr.rel (0) target = $region25
    $region24: #{tpu_custom_call.1} parent=1 // pred_region
      %34 = dma.done [#allocation3], 256
    $region25: #{tpu_custom_call.1} parent=1 // pred_fallthru
      _
    %v35 = vld [vmem:[%s0] sm:$0xff]
    %v36 = vld [vmem:[%s4] sm:$0x1]
    %v37 = vld [vmem:[%s4 + $0x1] sm:$0x1]
    %v38 = vld [vmem:[%s4 + $0x2] sm:$0x1]
    %v39 = vld [vmem:[#allocation2] sm:$0xff]
    %v40 = vld [vmem:[#allocation2 + $0x8] sm:$0xff]
    %v41 = vld [vmem:[%s2] sm:$0xff]
    %v42 = vld [vmem:[%s2 + $0x8] sm:$0xff]
    %v43 = vld [vmem:[%s2 + $0x10] sm:$0xff]
    %v44 = vld [vmem:[%s2 + $0x18] sm:$0xff]
    %v45 = vld [vmem:[%s3] sm:$0xff]
    %v46 = vld [vmem:[%s3 + $0x8] sm:$0xff]
    %v47 = vld [vmem:[%s3 + $0x10] sm:$0xff]
    %v48 = vld [vmem:[%s3 + $0x18] sm:$0xff]
    %v49 = vlaneseq
    %v50 = vshrl.u32 %v49, 7
    %v51 = vsub.s32 0, %v50
    %v52 = vrot.slane %v36, %v51
    %vm53 = vcmask 130048
    %v55 = vsel %vm53, %v35, 0
    %57 = vmatprep.subr.mxu0 0.0
    %58 = vmatpush1.msra.mxu0 %v39
    %59 = vmatprep.subr.mxu0 0.0
    %60 = vmatpush1.msra.mxu0 %v40
    %61 = vmatprep.subr.mxu0 0.0
    %62 = vmatpush1.msra.mxu0 0.0
    %63 = vmatprep.subr.mxu0 0.0
    %64 = vmatpush1.msra.mxu0 0.0
    %65 = vmatprep.subr.mxu0 0.0
    %66 = vmatpush1.msra.mxu0 0.0
    %67 = vmatprep.subr.mxu0 0.0
    %68 = vmatpush1.msra.mxu0 0.0
    %69 = vmatprep.subr.mxu0 0.0
    %70 = vmatpush1.msra.mxu0 0.0
    %71 = vmatprep.subr.mxu0 0.0
    %72 = vmatpush1.msra.mxu0 0.0
    %73 = vmatprep.subr.mxu0 0.0
    %74 = vmatpush1.msra.mxu0 0.0
    %75 = vmatprep.subr.mxu0 0.0
    %76 = vmatpush1.msra.mxu0 0.0
    %77 = vmatprep.subr.mxu0 0.0
    %78 = vmatpush1.msra.mxu0 0.0
    %79 = vmatprep.subr.mxu0 0.0
    %80 = vmatpush1.msra.mxu0 0.0
    %81 = vmatprep.subr.mxu0 0.0
    %82 = vmatpush1.msra.mxu0 0.0
    %83 = vmatprep.subr.mxu0 0.0
    %84 = vmatpush1.msra.mxu0 0.0
    %85 = vmatprep.subr.mxu0 0.0
    %86 = vmatpush1.msra.mxu0 0.0
    %87 = vmatprep.subr.mxu0 0.0
    %88 = vmatpush1.msra.mxu0 0.0
    %89 = vmatprep.subr.mxu0 0.0
    %90 = vmatpush1.msra.mxu0 0.0
    %91 = vmatprep.subr.mxu0 0.0
    %92 = vmatpush1.msra.mxu0 0.0
    %93 = vmatprep.subr.mxu0 0.0
    %94 = vmatpush1.msra.mxu0 0.0
    %95 = vmatprep.subr.mxu0 0.0
    %96 = vmatpush1.msra.mxu0 0.0
    %97 = vmatprep.subr.mxu0 0.0
    %98 = vmatpush1.msra.mxu0 0.0
    %99 = vmatprep.subr.mxu0 0.0
    %100 = vmatpush1.msra.mxu0 0.0
    %101 = vmatprep.subr.mxu0 0.0
    %102 = vmatpush1.msra.mxu0 0.0
    %103 = vmatprep.subr.mxu0 0.0
    %104 = vmatpush1.msra.mxu0 0.0
    %105 = vmatprep.subr.mxu0 0.0
    %106 = vmatpush1.msra.mxu0 0.0
    %107 = vmatprep.subr.mxu0 0.0
    %108 = vmatpush1.msra.mxu0 0.0
    %109 = vmatprep.subr.mxu0 0.0
    %110 = vmatpush1.msra.mxu0 0.0
    %111 = vmatprep.subr.mxu0 0.0
    %112 = vmatpush1.msra.mxu0 0.0
    %113 = vmatprep.subr.mxu0 0.0
    %114 = vmatpush1.msra.mxu0 0.0
    %115 = vmatprep.subr.mxu0 0.0
    %116 = vmatpush1.msra.mxu0 0.0
    %117 = vmatprep.subr.mxu0 0.0
    %118 = vmatpush1.msra.mxu0 0.0
    %119 = vmatprep.subr.mxu0 0.0
    %120 = vmatpush1.msra.mxu0 0.0
    %121 = vmatprep.mubr.f32.mxu0 0.0
    %122 = vmatmul.mubr.f32.gmra.mrb[0].mxu0 %v55
    %v123 = vpop.f32.mrb[0].mxu0
    %v124 = vadd.f32 %v52, %v123
    %v125 = vpop.f32.mrb[0].mxu0
    %126 = vdwg.mxu0
    %v127 = vmax.f32 %v124, 0.0
    %v128 = vlaneseq
    %v129 = vshrl.u32 %v128, 7
    %v130 = vsub.s32 0, %v129
    %v131 = vrot.slane %v37, %v130
    %vm132 = vcmask 261120
    %v134 = vsel %vm132, %v127, 0
    %136 = vmatprep.subr.mxu0 0.0
    %137 = vmatpush1.msra.mxu0 %v41
    %138 = vmatprep.subr.mxu0 0.0
    %139 = vmatpush1.msra.mxu0 %v42
    %140 = vmatprep.subr.mxu0 0.0
    %141 = vmatpush1.msra.mxu0 %v43
    %142 = vmatprep.subr.mxu0 0.0
    %143 = vmatpush1.msra.mxu0 %v44
    %144 = vmatprep.subr.mxu0 0.0
    %145 = vmatpush1.msra.mxu0 0.0
    %146 = vmatprep.subr.mxu0 0.0
    %147 = vmatpush1.msra.mxu0 0.0
    %148 = vmatprep.subr.mxu0 0.0
    %149 = vmatpush1.msra.mxu0 0.0
    %150 = vmatprep.subr.mxu0 0.0
    %151 = vmatpush1.msra.mxu0 0.0
    %152 = vmatprep.subr.mxu0 0.0
    %153 = vmatpush1.msra.mxu0 0.0
    %154 = vmatprep.subr.mxu0 0.0
    %155 = vmatpush1.msra.mxu0 0.0
    %156 = vmatprep.subr.mxu0 0.0
    %157 = vmatpush1.msra.mxu0 0.0
    %158 = vmatprep.subr.mxu0 0.0
    %159 = vmatpush1.msra.mxu0 0.0
    %160 = vmatprep.subr.mxu0 0.0
    %161 = vmatpush1.msra.mxu0 0.0
    %162 = vmatprep.subr.mxu0 0.0
    %163 = vmatpush1.msra.mxu0 0.0
    %164 = vmatprep.subr.mxu0 0.0
    %165 = vmatpush1.msra.mxu0 0.0
    %166 = vmatprep.subr.mxu0 0.0
    %167 = vmatpush1.msra.mxu0 0.0
    %168 = vmatprep.subr.mxu0 0.0
    %169 = vmatpush1.msra.mxu0 0.0
    %170 = vmatprep.subr.mxu0 0.0
    %171 = vmatpush1.msra.mxu0 0.0
    %172 = vmatprep.subr.mxu0 0.0
    %173 = vmatpush1.msra.mxu0 0.0
    %174 = vmatprep.subr.mxu0 0.0
    %175 = vmatpush1.msra.mxu0 0.0
    %176 = vmatprep.subr.mxu0 0.0
    %177 = vmatpush1.msra.mxu0 0.0
    %178 = vmatprep.subr.mxu0 0.0
    %179 = vmatpush1.msra.mxu0 0.0
    %180 = vmatprep.subr.mxu0 0.0
    %181 = vmatpush1.msra.mxu0 0.0
    %182 = vmatprep.subr.mxu0 0.0
    %183 = vmatpush1.msra.mxu0 0.0
    %184 = vmatprep.subr.mxu0 0.0
    %185 = vmatpush1.msra.mxu0 0.0
    %186 = vmatprep.subr.mxu0 0.0
    %187 = vmatpush1.msra.mxu0 0.0
    %188 = vmatprep.subr.mxu0 0.0
    %189 = vmatpush1.msra.mxu0 0.0
    %190 = vmatprep.subr.mxu0 0.0
    %191 = vmatpush1.msra.mxu0 0.0
    %192 = vmatprep.subr.mxu0 0.0
    %193 = vmatpush1.msra.mxu0 0.0
    %194 = vmatprep.subr.mxu0 0.0
    %195 = vmatpush1.msra.mxu0 0.0
    %196 = vmatprep.subr.mxu0 0.0
    %197 = vmatpush1.msra.mxu0 0.0
    %198 = vmatprep.subr.mxu0 0.0
    %199 = vmatpush1.msra.mxu0 0.0
    %200 = vmatprep.mubr.f32.mxu0 0.0
    %201 = vmatmul.mubr.f32.gmra.mrb[0].mxu0 %v134
    %v202 = vpop.f32.mrb[0].mxu0
    %v203 = vadd.f32 %v131, %v202
    %v204 = vpop.f32.mrb[0].mxu0
    %205 = vdwg.mxu0
    %v206 = vmax.f32 %v203, 0.0
    %v207 = vlaneseq
    %v208 = vshrl.u32 %v207, 7
    %v209 = vsub.s32 0, %v208
    %v210 = vrot.slane %v38, %v209
    %v212 = vsel %vm132, %v206, 0
    %214 = vmatprep.subr.mxu0 0.0
    %215 = vmatpush1.msra.mxu0 %v45
    %216 = vmatprep.subr.mxu0 0.0
    %217 = vmatpush1.msra.mxu0 %v46
    %218 = vmatprep.subr.mxu0 0.0
    %219 = vmatpush1.msra.mxu0 %v47
    %220 = vmatprep.subr.mxu0 0.0
    %221 = vmatpush1.msra.mxu0 %v48
    %222 = vmatprep.subr.mxu0 0.0
    %223 = vmatpush1.msra.mxu0 0.0
    %224 = vmatprep.subr.mxu0 0.0
    %225 = vmatpush1.msra.mxu0 0.0
    %226 = vmatprep.subr.mxu0 0.0
    %227 = vmatpush1.msra.mxu0 0.0
    %228 = vmatprep.subr.mxu0 0.0
    %229 = vmatpush1.msra.mxu0 0.0
    %230 = vmatprep.subr.mxu0 0.0
    %231 = vmatpush1.msra.mxu0 0.0
    %232 = vmatprep.subr.mxu0 0.0
    %233 = vmatpush1.msra.mxu0 0.0
    %234 = vmatprep.subr.mxu0 0.0
    %235 = vmatpush1.msra.mxu0 0.0
    %236 = vmatprep.subr.mxu0 0.0
    %237 = vmatpush1.msra.mxu0 0.0
    %238 = vmatprep.subr.mxu0 0.0
    %239 = vmatpush1.msra.mxu0 0.0
    %240 = vmatprep.subr.mxu0 0.0
    %241 = vmatpush1.msra.mxu0 0.0
    %242 = vmatprep.subr.mxu0 0.0
    %243 = vmatpush1.msra.mxu0 0.0
    %244 = vmatprep.subr.mxu0 0.0
    %245 = vmatpush1.msra.mxu0 0.0
    %246 = vmatprep.subr.mxu0 0.0
    %247 = vmatpush1.msra.mxu0 0.0
    %248 = vmatprep.subr.mxu0 0.0
    %249 = vmatpush1.msra.mxu0 0.0
    %250 = vmatprep.subr.mxu0 0.0
    %251 = vmatpush1.msra.mxu0 0.0
    %252 = vmatprep.subr.mxu0 0.0
    %253 = vmatpush1.msra.mxu0 0.0
    %254 = vmatprep.subr.mxu0 0.0
    %255 = vmatpush1.msra.mxu0 0.0
    %256 = vmatprep.subr.mxu0 0.0
    %257 = vmatpush1.msra.mxu0 0.0
    %258 = vmatprep.subr.mxu0 0.0
    %259 = vmatpush1.msra.mxu0 0.0
    %260 = vmatprep.subr.mxu0 0.0
    %261 = vmatpush1.msra.mxu0 0.0
    %262 = vmatprep.subr.mxu0 0.0
    %263 = vmatpush1.msra.mxu0 0.0
    %264 = vmatprep.subr.mxu0 0.0
    %265 = vmatpush1.msra.mxu0 0.0
    %266 = vmatprep.subr.mxu0 0.0
    %267 = vmatpush1.msra.mxu0 0.0
    %268 = vmatprep.subr.mxu0 0.0
    %269 = vmatpush1.msra.mxu0 0.0
    %270 = vmatprep.subr.mxu0 0.0
    %271 = vmatpush1.msra.mxu0 0.0
    %272 = vmatprep.subr.mxu0 0.0
    %273 = vmatpush1.msra.mxu0 0.0
    %274 = vmatprep.subr.mxu0 0.0
    %275 = vmatpush1.msra.mxu0 0.0
    %276 = vmatprep.subr.mxu0 0.0
    %277 = vmatpush1.msra.mxu0 0.0
    %278 = vmatprep.mubr.f32.mxu0 0.0
    %279 = vmatmul.mubr.f32.gmra.mrb[0].mxu0 %v212
    %v280 = vpop.f32.mrb[0].mxu0
    %v281 = vadd.f32 %v210, %v280
    %v282 = vpop.f32.mrb[0].mxu0
    %283 = vdwg.mxu0
    %v284 = vlaneseq
    %v285 = vand.u32 %v284, 127
    %vm286 = vcmp.lt.s32.totalorder %v285, 4
    %v287 = vxor.u32 %v281, 2147483648
    %v288 = vmul.f32 %v287, 1.442695
    %v289 = vpow.pop %v288
    %v290 = vadd.f32 %v289, 1.0
    %v291 = vrcp.pop %v290
    %v292 = vmul.f32 1.0, %v291
    %v293 = vtanh.pop %v281
    %v294 = vsel %vm286, %v292, %v293
    %vm295 = vcmask 64512
    %296 = vst.msk [vmem:[#allocation5] sm:$0xff] %vm295, %v294
    // Predicated region
    $region26: #{tpu_custom_call.1} parent=1 // pred_check
      _
    $region27: #{tpu_custom_call.1} parent=1 // pred_check_branch
      %298 = sbr.rel (0) target = $region29
    $region28: #{tpu_custom_call.1} parent=1 // pred_region
      %s300 = ssub.s32 128, 128
      %301 = vsyncadd [#allocation4], %s300
      %s303 = sshll.u32 [#allocation5], 4
      %s304 = int_to_ptr.vmem [resolvable:$true] %s303
      %306 = dma.vmem_to_hbm [thread:$0]  %s304, 128, %s5, [#allocation4]
    $region29: #{tpu_custom_call.1} parent=1 // pred_fallthru
      _
    // Predicated region
    $region30: #{tpu_custom_call.1} parent=1 // pred_check
      _
    $region31: #{tpu_custom_call.1} parent=1 // pred_check_branch
      %308 = sbr.rel (0) target = $region33
    $region32: #{tpu_custom_call.1} parent=1 // pred_region
      %309 = dma.done [#allocation4], 128
    $region33: #{tpu_custom_call.1} parent=1 // pred_fallthru
      _
    %310 = vsyncpa [#allocation3], 1
    %311 = vsyncpa [#allocation4], 1

</llo_original>
